<compile_context>
chip_gen: v7x
topology: tpu7x:2x2x1
jax: 0.10.0
libtpu: 0.0.40
codegen_flags: <defaults>
</compile_context>

<pallas_src>
import jax
import jax.numpy as jnp
from jax.experimental import pallas as pl
from jax.experimental.pallas import tpu as pltpu

LANE = 128                    # TPU lane width (last dim)
SUB = 8                       # sublane granularity (second-to-last dim)
ROW_CHUNK = SUB * LANE        # 1024: batch split boundary -> rows always sublane-aligned
TM_MAX = 2048                 # max rows/tile: 2048*128*4B = 1 MiB per buffer
SMALL_BATCH = 2 * ROW_CHUNK   # below this, a fused XLA FMA beats the kernel launch


def _round_up(a, m):
    return ((a + m - 1) // m) * m


# ------------------------- Pallas kernel ------------------------- #
def dnn_kernel(ab_ref, x_ref, o_ref):
    # Folded affine chain: y = a * x + b   (pure VPU, no MXU, no weight tiles)
    a = ab_ref[0, 0]
    b = ab_ref[0, 1]
    o_ref[...] = x_ref[...] * a + b


# ------------------------- wrapper ------------------------- #
def _fold_affine(params):
    """Collapse fc1/fc2/fc3 into y = a*x + b (a, b scalars)."""
    w1, w2, w3 = params["fc1_w"], params["fc2_w"], params["fc3_w"]
    b1, b2, b3 = params["fc1_b"], params["fc2_b"], params["fc3_b"]
    a = (w1.T @ w2.T @ w3.T).reshape(()).astype(jnp.float32)
    b = ((b1 @ w2.T + b2) @ w3.T + b3).reshape(()).astype(jnp.float32)
    return a, b


def dnn_forward(x, params):
    """x: (B, 1) float32.  params: dict of PyTorch-convention weights/biases."""
    B = x.shape[0]
    a_s, b_s = _fold_affine(params)
    x_flat = x.reshape(-1).astype(jnp.float32)

    # ---- small-batch fast path: launch overhead >> work ----
    if B < SMALL_BATCH:
        return (x_flat * a_s + b_s).reshape(B, 1)

    # Split at a (8*128)-element boundary: bulk via kernel, ragged tail via XLA.
    B_main = (B // ROW_CHUNK) * ROW_CHUNK
    rows = B_main // LANE                       # multiple of 8 by construction
    x_main = x_flat if B_main == B else x_flat[:B_main]
    x_main = x_main.reshape(rows, LANE)         # free metadata reshape when B_main == B

    # Tile rows: multiple of 8, capped at TM_MAX, aim for >= 4 grid steps
    # (pipeline depth; lets v7x's two TensorCores both stream).
    TM = max(SUB, min(TM_MAX, _round_up(pl.cdiv(rows, 4), SUB)))
    grid = (pl.cdiv(rows, TM),)                 # trailing partial block is masked

    ab = jnp.stack([a_s, b_s]).reshape(1, 2)    # packed scalars for SMEM

    out_main = pl.pallas_call(
        dnn_kernel,
        out_shape=jax.ShapeDtypeStruct((rows, LANE), jnp.float32),
        grid=grid,
        in_specs=[
            pl.BlockSpec(memory_space=pltpu.MemorySpace.SMEM),   # (1,2) a,b scalars
            pl.BlockSpec((TM, LANE), lambda i: (i, 0)),          # streamed batch tile
        ],
        out_specs=pl.BlockSpec((TM, LANE), lambda i: (i, 0)),
        compiler_params=pltpu.CompilerParams(
            dimension_semantics=("parallel",),
        ),
    )(ab, x_main)

    out_flat = out_main.reshape(-1)             # free metadata reshape
    if B_main == B:
        return out_flat.reshape(B, 1)           # zero-copy path (B multiple of 1024)

    # Ragged tail (< 1024 elements): negligible plain-JAX FMA.
    tail = x_flat[B_main:] * a_s + b_s
    return jnp.concatenate([out_flat, tail]).reshape(B, 1)


# ------------------------- reference (plain JAX) ------------------------- #
def dnn_reference(x, params):
    h = x @ params["fc1_w"].T + params["fc1_b"]
    h = h @ params["fc2_w"].T + params["fc2_b"]
    h = h @ params["fc3_w"].T + params["fc3_b"]
    return h


# ------------------------- parameter init ------------------------- #
def init_params(key):
    """Deterministic init mimicking nn.Linear's U(-1/sqrt(in), 1/sqrt(in))."""
    ks = jax.random.split(key, 6)

    def lin(kw, kb, fan_in, fan_out):
        bound = 1.0 / jnp.sqrt(jnp.float32(fan_in))
        w = jax.random.uniform(kw, (fan_out, fan_in), jnp.float32, -bound, bound)
        b = jax.random.uniform(kb, (fan_out,), jnp.float32, -bound, bound)
        return w, b

    w1, b1 = lin(ks[0], ks[1], 1, 5)
    w2, b2 = lin(ks[2], ks[3], 5, 5)
    w3, b3 = lin(ks[4], ks[5], 5, 1)
    return {
        "fc1_w": w1, "fc1_b": b1,
        "fc2_w": w2, "fc2_b": b2,
        "fc3_w": w3, "fc3_b": b3,
    }


if __name__ == "__main__":
    key = jax.random.PRNGKey(0)
    kp, kx = jax.random.split(key)
    params = init_params(kp)

    # Exercise all three paths: small-batch fast path, aligned (zero-copy) kernel
    # path, and ragged batch (kernel bulk + JAX tail).
    for B in (8, 8192, 9000):
        x = jax.random.normal(jax.random.fold_in(kx, B), (B, 1), jnp.float32)
        out = jax.block_until_ready(dnn_forward(x, params))
        ref = dnn_reference(x, params)
        assert out.shape == (B, 1), (B, out.shape)
        assert jnp.allclose(out, ref, atol=1e-5, rtol=1e-5), (
            B, float(jnp.abs(out - ref).max()))

    print("KERNEL_OK")
</pallas_src>

<mosaic_0001>
module attributes {stable_mosaic.version = 11 : i64} {
  func.func @dnn_kernel(%arg0: i32, %arg1: memref<1x2xf32, #tpu.memory_space<smem>>, %arg2: memref<16x128xf32, #tpu.memory_space<vmem>>, %arg3: memref<16x128xf32, #tpu.memory_space<vmem>>) attributes {dimension_semantics = [#tpu.dimension_semantics<parallel>], iteration_bounds = array<i64: 4>, scalar_prefetch = 0 : i64, scratch_operands = 0 : i64, tpu.core_type = #tpu.core_type<tc>, window_params = [{transform_indices = @transform_0, window_bounds = array<i64: 1, 2>}, {transform_indices = @transform_1, window_bounds = array<i64: 16, 128>}, {transform_indices = @transform_2, window_bounds = array<i64: 16, 128>}]} {
    %c0 = arith.constant 0 : index
    %c0_0 = arith.constant 0 : index
    %0 = memref.load %arg1[%c0, %c0_0] : memref<1x2xf32, #tpu.memory_space<smem>>
    %c0_1 = arith.constant 0 : index
    %c1 = arith.constant 1 : index
    %1 = memref.load %arg1[%c0_1, %c1] : memref<1x2xf32, #tpu.memory_space<smem>>
    %c0_2 = arith.constant 0 : index
    %c0_3 = arith.constant 0 : index
    %2 = vector.load %arg2[%c0_2, %c0_3] : memref<16x128xf32, #tpu.memory_space<vmem>>, vector<16x128xf32>
    %3 = vector.broadcast %0 : f32 to vector<16x128xf32>
    %4 = arith.mulf %2, %3 : vector<16x128xf32>
    %5 = vector.broadcast %1 : f32 to vector<16x128xf32>
    %6 = arith.addf %4, %5 : vector<16x128xf32>
    %c0_4 = arith.constant 0 : index
    %c0_5 = arith.constant 0 : index
    %7 = vector.load %arg3[%c0_4, %c0_5] : memref<16x128xf32, #tpu.memory_space<vmem>>, vector<16x128xf32>
    tpu.vector_store %arg3[%c0_4, %c0_5], %6 {strides = array<i32>} : memref<16x128xf32, #tpu.memory_space<vmem>>, vector<16x128xf32>,
    return
  }
  func.func @transform_0(%arg0: i32) -> (i32, i32) {
    %c0_i32 = arith.constant 0 : i32
    %c0_i32_0 = arith.constant 0 : i32
    %c0_i32_1 = arith.constant 0 : i32
    return %c0_i32, %c0_i32_0 : i32, i32
  }
  func.func @transform_1(%arg0: i32) -> (i32, i32) {
    %c0_i32 = arith.constant 0 : i32
    %c0_i32_0 = arith.constant 0 : i32
    return %arg0, %c0_i32 : i32, i32
  }
  func.func @transform_2(%arg0: i32) -> (i32, i32) {
    %c0_i32 = arith.constant 0 : i32
    %c0_i32_0 = arith.constant 0 : i32
    return %arg0, %c0_i32 : i32, i32
  }
}

</mosaic_0001>

<llo_original>
// kernel: tpu_custom_call.1
$region0: #{tpu_custom_call.1}
  #allocation0 [shape = 'u32[]', space=smem, size = 0x4, offset = 0x4, fixed_abs, tag = 'smem constant byte address 0x4 - core index']
  #allocation1 [shape = 'u32[144,128]{1,0:T(1,128)}', space=vmem, size = 0x12000, scoped, tag = 'internal scratch']
  %s0 = inlined_call_operand.hbm [shape: f32[1,2], index: 0, kind: input, shape index: {}]
  %s1 = inlined_call_operand.hbm [shape: f32[64,128], index: 1, kind: input, shape index: {}]
  %s2 = inlined_call_operand.hbm [shape: f32[64,128], index: 2, kind: output, shape index: {}]
  %s3 = sld [smem:[#allocation0]]
  $region49: #{tpu_custom_call.1} parent=0
    _
  %s5 = ssub.s32 1, %s3
  %s6 = scalar_select 0, %s5, %s3
  $region1: #{tpu_custom_call.1} parent=0
    #allocation2 [shape = 'u8[512]{0}', space=smem, size = 0x200, scoped, tag = 'input window, operand 0, single buffered']
    #allocation3 [shape = 's32[2]{0}', space=sflag, size = 0x8, scoped, tag = 'scoped memory for tpu_custom_call.1']
    #allocation4 [shape = 's32[2]{0}', space=sflag, size = 0x8, scoped, tag = 'scoped memory for tpu_custom_call.1']
    #allocation5 [shape = 's32[2]{0}', space=sflag, size = 0x8, scoped, tag = 'scoped memory for tpu_custom_call.1']
    #allocation6 [shape = 'u8[16384]{0}', space=vmem, size = 0x4000, scoped, tag = 'input window, operand 1']
    #allocation7 [shape = 'u8[16384]{0}', space=vmem, size = 0x4000, scoped, tag = 'output window, operand 0']
    %7 = vsyncpa [#allocation5], 0
    %8 = vsyncpa [#allocation3], 0
    %s9 = scalar_lea.sflag [#allocation3], 1
    %10 = vsyncpa %s9, 0
    %11 = vsyncpa [#allocation4], 0
    %s12 = scalar_lea.sflag [#allocation4], 1
    %13 = vsyncpa %s12, 0
    loop: start=0, step=1, limit=6
    $region2: #{tpu_custom_call.1} parent=1 // loop_pre_header
      _
    $region3: #{tpu_custom_call.1} parent=1 // loop_header
      %s15 = sphi 0, %s19
      %p16 = scmp.ge.s32.totalorder %s15, 6
      %s23 = sphi 0, %s23
      %s25 = sphi 0, %s23
      %s26 = sphi 0, %s25
      %s40 = sphi 0, %s26
      %s46 = sphi 0, %s48
      %s49 = sphi 0, %s46
      %s50 = sphi 0, %s49
      %s66 = sphi 0, %s50
      %s72 = sphi 0, %s74
      %s75 = sphi 0, %s72
      %s76 = sphi 0, %s75
      %s92 = sphi 0, %s76
    $region4: #{tpu_custom_call.1} parent=1 // loop_header_branch
      %18 = sbr.rel (%p16) target = $region8
    $region5: #{tpu_custom_call.1} parent=1 // loop_body
      %s20 = ssub.s32 %s15, 1
      %s21 = ssub.s32 %s15, 2
      %s22 = sadd.s32 %s15, 1
      %s24 = sadd.s32 %s23, 1
      %p27 = scmp.eq.s32.totalorder %s15, 3
      %p28 = scmp.ne.s32.totalorder %s23, %s25
      %p29 = scmp.eq.s32.totalorder %s15, 0
      %p30 = por %p28, %p29
      %p31 = scmp.ne.s32.totalorder %s23, %s25
      %p32 = scmp.eq.s32.totalorder %s20, 3
      %p33 = por %p31, %p32
      %p34 = scmp.ne.s32.totalorder %s25, %s26
      %p35 = scmp.eq.s32.totalorder %s20, 0
      %p36 = por %p34, %p35
      %p37 = scmp.ne.s32.totalorder %s25, %s26
      %p38 = scmp.eq.s32.totalorder %s21, 3
      %p39 = por %p37, %p38
      %p41 = scmp.ne.s32.totalorder %s26, %s40
      %p42 = scmp.eq.s32.totalorder %s21, 0
      %p43 = por %p41, %p42
      %s44 = ssub.s32 %s15, %s22
      %p45 = scmp.eq.s32.totalorder %s44, 0
      %s47 = sadd.s32 %s46, 1
      %s48 = scalar_select %p45, %s46, %s47
      %p51 = pneg %p45
      %p52 = scmp.eq.s32.totalorder %s15, 3
      %p53 = por %p51, %p52
      %p54 = scmp.ne.s32.totalorder %s46, %s49
      %p55 = scmp.eq.s32.totalorder %s15, 0
      %p56 = por %p54, %p55
      %p57 = scmp.ne.s32.totalorder %s46, %s49
      %p58 = scmp.eq.s32.totalorder %s20, 3
      %p59 = por %p57, %p58
      %p60 = scmp.ne.s32.totalorder %s49, %s50
      %p61 = scmp.eq.s32.totalorder %s20, 0
      %p62 = por %p60, %p61
      %p63 = scmp.ne.s32.totalorder %s49, %s50
      %p64 = scmp.eq.s32.totalorder %s21, 3
      %p65 = por %p63, %p64
      %p67 = scmp.ne.s32.totalorder %s50, %s66
      %p68 = scmp.eq.s32.totalorder %s21, 0
      %p69 = por %p67, %p68
      %s70 = ssub.s32 %s15, %s22
      %p71 = scmp.eq.s32.totalorder %s70, 0
      %s73 = sadd.s32 %s72, 1
      %s74 = scalar_select %p71, %s72, %s73
      %p77 = pneg %p71
      %p78 = scmp.eq.s32.totalorder %s15, 3
      %p79 = por %p77, %p78
      %p80 = scmp.ne.s32.totalorder %s72, %s75
      %p81 = scmp.eq.s32.totalorder %s15, 0
      %p82 = por %p80, %p81
      %p83 = scmp.ne.s32.totalorder %s72, %s75
      %p84 = scmp.eq.s32.totalorder %s20, 3
      %p85 = por %p83, %p84
      %p86 = scmp.ne.s32.totalorder %s75, %s76
      %p87 = scmp.eq.s32.totalorder %s20, 0
      %p88 = por %p86, %p87
      %p89 = scmp.ne.s32.totalorder %s75, %s76
      %p90 = scmp.eq.s32.totalorder %s21, 3
      %p91 = por %p89, %p90
      %p93 = scmp.ne.s32.totalorder %s76, %s92
      %p94 = scmp.eq.s32.totalorder %s21, 0
      %p95 = por %p93, %p94
      %p96 = scmp.le.s32.totalorder 1, %s15
      %p97 = scmp.lt.s32.totalorder %s15, 5
      %p98 = pnand %p96, %p97
      %p99 = pneg %p98
      // Predicated region
      $region9: #{tpu_custom_call.1} parent=5 // pred_check
        _
      $region10: #{tpu_custom_call.1} parent=5 // pred_check_branch
        %101 = sbr.rel (%p98) target = $region12
      $region11: #{tpu_custom_call.1} parent=5 // pred_region
        %s102 = ssub.s32 %s15, 1
        // Predicated region
        $region13: #{tpu_custom_call.1} parent=11 // pred_check
          %p103 = pneg %p36
        $region14: #{tpu_custom_call.1} parent=11 // pred_check_branch
          %105 = sbr.rel (%p103) target = $region16
        $region15: #{tpu_custom_call.1} parent=11 // pred_region
          %s107 = ssub.s32 16, 16
          %108 = vsyncadd [#allocation5], %s107
          %111 = dma.hbm_to_smem %s0, 16, [#allocation2], [#allocation5]
        $region16: #{tpu_custom_call.1} parent=11 // pred_fallthru
          _
      $region12: #{tpu_custom_call.1} parent=5 // pred_fallthru
        _
      %p112 = scmp.lt.s32.totalorder %s15, 4
      // Predicated region
      $region17: #{tpu_custom_call.1} parent=5 // pred_check
        %p113 = pneg %p112
      $region18: #{tpu_custom_call.1} parent=5 // pred_check_branch
        %115 = sbr.rel (%p113) target = $region20
      $region19: #{tpu_custom_call.1} parent=5 // pred_region
        // Predicated region
        $region21: #{tpu_custom_call.1} parent=19 // pred_check
          %p116 = pneg %p56
        $region22: #{tpu_custom_call.1} parent=19 // pred_check_branch
          %118 = sbr.rel (%p116) target = $region24
        $region23: #{tpu_custom_call.1} parent=19 // pred_region
          %s119 = sand.u32 %s46, 1
          %s120 = scalar_lea.sflag [#allocation3], %s119
          %s121 = sand.u32 %s46, 1
          %s122 = smul.addr %s121, 16
          %s123 = scalar_lea.vmem [#allocation6], %s122
          %s124 = smul.u32 2, %s15
          %s126 = ssub.s32 256, 256
          %127 = vsyncadd %s120, %s126
          %s128 = smul.addr %s124, 128
          %s129 = scalar_lea.hbm %s1, %s128
          %s130 = sshll.u32 %s123, 4
          %s131 = int_to_ptr.vmem [resolvable:$true] %s130
          %136 = dma.hbm_to_vmem [thread:$0]  %s129, 256, %s131, %s120, 128, 128, 8
        $region24: #{tpu_custom_call.1} parent=19 // pred_fallthru
          _
      $region20: #{tpu_custom_call.1} parent=5 // pred_fallthru
        _
      %p137 = scmp.le.s32.totalorder 1, %s15
      %p138 = scmp.lt.s32.totalorder %s15, 5
      %p139 = pnand %p137, %p138
      %p140 = pneg %p139
      // Predicated region
      $region25: #{tpu_custom_call.1} parent=5 // pred_check
        _
      $region26: #{tpu_custom_call.1} parent=5 // pred_check_branch
        %142 = sbr.rel (%p139) target = $region28
      $region27: #{tpu_custom_call.1} parent=5 // pred_region
        %s143 = ssub.s32 %s15, 1
        // Predicated region
        $region29: #{tpu_custom_call.1} parent=27 // pred_check
          %p144 = pneg %p36
        $region30: #{tpu_custom_call.1} parent=27 // pred_check_branch
          %146 = sbr.rel (%p144) target = $region32
        $region31: #{tpu_custom_call.1} parent=27 // pred_region
          %147 = dma.done [#allocation5], 16
        $region32: #{tpu_custom_call.1} parent=27 // pred_fallthru
          _
        %s148 = sand.u32 %s49, 1
        %s149 = scalar_lea.sflag [#allocation3], %s148
        %s150 = sand.u32 %s49, 1
        %s151 = smul.addr %s150, 16
        %s152 = scalar_lea.vmem [#allocation6], %s151
        // Predicated region
        $region33: #{tpu_custom_call.1} parent=27 // pred_check
          %p153 = pneg %p62
        $region34: #{tpu_custom_call.1} parent=27 // pred_check_branch
          %155 = sbr.rel (%p153) target = $region36
        $region35: #{tpu_custom_call.1} parent=27 // pred_region
          %156 = dma.done %s149, 256
        $region36: #{tpu_custom_call.1} parent=27 // pred_fallthru
          _
        %157 = sfence
        %p158 = pneg %p36
        %p159 = pneg %p33
        %s160 = sand.u32 %s49, 1
        %s161 = scalar_lea.sflag [#allocation3], %s160
        %s162 = sand.u32 %s49, 1
        %s163 = smul.addr %s162, 16
        %s164 = scalar_lea.vmem [#allocation6], %s163
        %p165 = pneg %p62
        %p166 = pneg %p59
        %p167 = pneg %p88
        %p168 = pneg %p85
        %s169 = sand.u32 %s75, 1
        %s170 = scalar_lea.sflag [#allocation4], %s169
        %s171 = sand.u32 %s75, 1
        %s172 = smul.addr %s171, 16
        %s173 = scalar_lea.vmem [#allocation7], %s172
        %s174 = smul.u32 2, %s20
        %s175 = smul.u32 2, %s20
        %s176 = sld [smem:[#allocation2]]
        %s177 = sld [smem:[#allocation2 + $0x1]]
        %v178 = vld [vmem:[%s152] sm:$0xff]
        %v179 = vld [vmem:[%s152 + $0x8] sm:$0xff]
        %v180 = vstv %s176
        %v181 = vmul.f32 %v178, %v180
        %v182 = vmul.f32 %v179, %v180
        %v183 = vstv %s177
        %v184 = vadd.f32 %v181, %v183
        %v185 = vadd.f32 %v182, %v183
        %186 = vst [vmem:[%s173] sm:$0xff] %v184
        %187 = vst [vmem:[%s173 + $0x8] sm:$0xff] %v185
        %s188 = sand.u32 %s75, 1
        %s189 = scalar_lea.sflag [#allocation4], %s188
        %s190 = sand.u32 %s75, 1
        %s191 = smul.addr %s190, 16
        %s192 = scalar_lea.vmem [#allocation7], %s191
        // Predicated region
        $region37: #{tpu_custom_call.1} parent=27 // pred_check
          %p193 = pneg %p85
        $region38: #{tpu_custom_call.1} parent=27 // pred_check_branch
          %195 = sbr.rel (%p193) target = $region40
        $region39: #{tpu_custom_call.1} parent=27 // pred_region
          %s196 = smul.u32 2, %s20
          %s198 = ssub.s32 256, 256
          %199 = vsyncadd %s189, %s198
          %s200 = smul.addr %s196, 128
          %s201 = scalar_lea.hbm %s2, %s200
          %s202 = sshll.u32 %s192, 4
          %s203 = int_to_ptr.vmem [resolvable:$true] %s202
          %208 = dma.vmem_to_hbm [thread:$0]  %s203, 256, %s201, %s189, 128, 128, 8
        $region40: #{tpu_custom_call.1} parent=27 // pred_fallthru
          _
      $region28: #{tpu_custom_call.1} parent=5 // pred_fallthru
        _
      %p209 = scmp.le.s32.totalorder 2, %s15
      // Predicated region
      $region41: #{tpu_custom_call.1} parent=5 // pred_check
        %p210 = pneg %p209
      $region42: #{tpu_custom_call.1} parent=5 // pred_check_branch
        %212 = sbr.rel (%p210) target = $region44
      $region43: #{tpu_custom_call.1} parent=5 // pred_region
        %s213 = ssub.s32 %s15, 2
        // Predicated region
        $region45: #{tpu_custom_call.1} parent=43 // pred_check
          %p214 = pneg %p91
        $region46: #{tpu_custom_call.1} parent=43 // pred_check_branch
          %216 = sbr.rel (%p214) target = $region48
        $region47: #{tpu_custom_call.1} parent=43 // pred_region
          %s217 = sand.u32 %s76, 1
          %s218 = scalar_lea.sflag [#allocation4], %s217
          %s219 = sand.u32 %s76, 1
          %s220 = smul.addr %s219, 16
          %s221 = scalar_lea.vmem [#allocation7], %s220
          %222 = dma.done %s218, 256
        $region48: #{tpu_custom_call.1} parent=43 // pred_fallthru
          _
      $region44: #{tpu_custom_call.1} parent=5 // pred_fallthru
        _
    $region6: #{tpu_custom_call.1} parent=1 // loop_footer
      %s19 = sadd.s32 1, %s15
    $region7: #{tpu_custom_call.1} parent=1 // loop_footer_branch
      %14 = sbr.rel target = $region3
    $region8: #{tpu_custom_call.1} parent=1 // loop_exit
      _
    %223 = vsyncpa [#allocation3], 1
    %s224 = scalar_lea.sflag [#allocation3], 1
    %225 = vsyncpa %s224, 1
    %226 = vsyncpa [#allocation4], 1
    %s227 = scalar_lea.sflag [#allocation4], 1
    %228 = vsyncpa %s227, 1
    %229 = vsyncpa [#allocation5], 1
    %s230 = scalar_lea.sflag [#allocation5], 1
    %231 = vsyncpa %s230, 1

</llo_original>
